<compile_context>
chip_gen: v7x
topology: tpu7x:2x2x1
jax: 0.10.0
libtpu: 0.0.40
codegen_flags: <defaults>
</compile_context>

<pallas_src>
import math

import numpy as np
import jax
import jax.numpy as jnp
from jax.experimental import pallas as pl
from jax.experimental.pallas import tpu as pltpu


def make_gaussian_weight(channels, kernel_size, sigma, dim=2):
    """Reproduces GaussianSmoothing.__init__ exactly (including the /(2*std) form)."""
    if isinstance(kernel_size, (int, float)):
        kernel_size = [kernel_size] * dim
    if isinstance(sigma, (int, float)):
        sigma = [sigma] * dim
    kernel = jnp.array(1.0, dtype=jnp.float32)
    meshgrids = jnp.meshgrid(
        *[jnp.arange(size, dtype=jnp.float32) for size in kernel_size], indexing="ij"
    )
    for size, std, mgrid in zip(kernel_size, sigma, meshgrids):
        mean = (size - 1) / 2
        kernel = kernel * (
            1.0 / (std * math.sqrt(2 * math.pi))
            * jnp.exp(-(((mgrid - mean) / (2 * std)) ** 2))
        )
    kernel = kernel / jnp.sum(kernel)
    kernel = kernel.reshape((1, 1) + kernel.shape)            # (1, 1, KH, KW)
    kernel = jnp.tile(kernel, (channels, 1, 1, 1))            # (C, 1, KH, KW)
    return kernel


def _round_up(a, m):
    return (a + m - 1) // m * m


def _to_numpy_or_none(a):
    """Concrete host copy, or None if `a` is a tracer (wrapper used under jit)."""
    try:
        return np.asarray(a)
    except Exception:
        return None


def _choose_lane_groups(groups_needed, h, w, ho, wo, in_itemsize, out_itemsize,
                        budget_bytes=20 << 20):
    """Number of 128-lane channel groups per grid step.

    Padding-aware VMEM accounting: double-buffered in/out tiles (sublane dim
    rounded up to 8, lane dim already dense = 128) plus the live f32
    intermediates of the two 1-D passes.  Budget (~20 MiB) sits well under the
    48 MiB vmem limit we request, which itself fits v7x's 64 MiB/TC physical
    VMEM and raises the v5e/v6e scoped defaults.
    """
    lane = 128
    in_tile = h * _round_up(w, 8) * lane * in_itemsize * 2          # double-buffered
    out_tile = ho * _round_up(wo, 8) * lane * out_itemsize * 2      # double-buffered
    interm = (h + ho) * _round_up(wo, 8) * lane * 4                 # f32 tmp + acc
    per_group = max(1, in_tile + out_tile + interm)
    g = max(1, int(budget_bytes // per_group))
    if groups_needed >= 2:
        # Keep at least 2 grid steps so v7x's two TensorCores both get work.
        g = min(g, pl.cdiv(groups_needed, 2))
    return min(g, groups_needed)
    # TODO(synk): for very large H*W (single 128-lane group over the VMEM budget),
    # add halo tiling over H via pl.Element offsets instead of one big block.


def _tap_pass(taps_ref, k, window, fold):
    """acc = sum_i taps[i] * window(i); folds pairs when taps are symmetric."""
    if fold and k > 1:
        half = k // 2
        acc = None
        for i in range(half):
            term = taps_ref[i] * (window(i) + window(k - 1 - i))
            acc = term if acc is None else acc + term
        if k % 2 == 1:
            acc = acc + taps_ref[half] * window(half)
        return acc
    acc = taps_ref[0] * window(0)
    for i in range(1, k):
        acc = acc + taps_ref[i] * window(i)
    return acc


def gaussian_smoothing_pallas(x, weight):
    """Depthwise 2D 'valid' convolution with a shared, separable Gaussian kernel.

    PRECONDITION (asserted when `weight` is concrete, assumed under jit): the
    weight is the module's Gaussian, i.e. identical across channels and an exact
    outer product of 1-D taps.  Arbitrary (C,1,KH,KW) weights are NOT supported.
    """
    N, C, H, W = x.shape
    Cw, one, KH, KW = weight.shape
    assert Cw == C and one == 1
    assert KH <= H and KW <= W, "kernel_size must not exceed the spatial dims"
    Ho, Wo = H - KH + 1, W - KW + 1

    # Exact rank-1 decomposition: K = rowsum(K) ⊗ (colsum(K) / sum(K)).
    w2d = weight[0, 0].astype(jnp.float32)                   # (KH, KW)
    kh_taps = jnp.sum(w2d, axis=1)                            # (KH,) vertical taps
    kw_taps = jnp.sum(w2d, axis=0) / jnp.sum(w2d)             # (KW,) horizontal taps

    # Host-side precondition checks + symmetric-fold decision (skipped under jit).
    fold_h = fold_w = False
    w_np = _to_numpy_or_none(weight)
    if w_np is not None:
        assert np.max(np.abs(w_np - w_np[0:1])) <= 1e-7, \
            "gaussian_smoothing_pallas: weight must be identical across channels"
        kh_np = np.asarray(kh_taps)
        kw_np = np.asarray(kw_taps)
        assert np.max(np.abs(np.outer(kh_np, kw_np) - w_np[0, 0])) <= 1e-5, \
            "gaussian_smoothing_pallas: weight must be separable (rank-1)"
        fold_h = bool(np.allclose(kh_np, kh_np[::-1], rtol=1e-6, atol=1e-8))
        fold_w = bool(np.allclose(kw_np, kw_np[::-1], rtol=1e-6, atol=1e-8))

    # ---- Lane-dense channels-last layout: (H, W, NC_pad), NC_pad % 128 == 0 ----
    NC = N * C
    groups_needed = pl.cdiv(NC, 128)
    g = _choose_lane_groups(groups_needed, H, W, Ho, Wo,
                            jnp.dtype(x.dtype).itemsize, jnp.dtype(x.dtype).itemsize)
    ncb = g * 128                                     # lanes per grid step
    num_steps = pl.cdiv(groups_needed, g)
    NCp = num_steps * ncb                             # padded channel count

    x_cl = jnp.transpose(x.reshape(NC, H, W), (1, 2, 0))       # (H, W, NC)
    if NCp != NC:
        x_cl = jnp.pad(x_cl, ((0, 0), (0, 0), (0, NCp - NC)))  # zero-pad lanes

    def kernel(kh_ref, kw_ref, x_ref, o_ref):
        # kh_ref: (KH,) f32 SMEM, kw_ref: (KW,) f32 SMEM (scalar taps -> VPU splats)
        # x_ref : (H, W, ncb) VMEM tile, o_ref: (Ho, Wo, ncb) VMEM tile
        # Horizontal pass (W = sublane axis): shifted windows read from the ref;
        # lane axis (channels) is untouched -> no lane rotates, no masked stores.
        def w_window(j):
            return x_ref[:, j:j + Wo, :].astype(jnp.float32)
        tmp = _tap_pass(kw_ref, KW, w_window, fold_w)          # (H, Wo, ncb) f32

        # Vertical pass (H = major axis): pure value subsetting, no relayout.
        def h_window(i):
            return tmp[i:i + Ho]
        acc = _tap_pass(kh_ref, KH, h_window, fold_h)          # (Ho, Wo, ncb) f32

        o_ref[...] = acc.astype(o_ref.dtype)

    out_cl = pl.pallas_call(
        kernel,
        out_shape=jax.ShapeDtypeStruct((Ho, Wo, NCp), x.dtype),
        grid=(num_steps,),
        in_specs=[
            # Shared 1-D taps, resident in SMEM (single tiny transfer, scalar reads).
            pl.BlockSpec(memory_space=pltpu.MemorySpace.SMEM),
            pl.BlockSpec(memory_space=pltpu.MemorySpace.SMEM),
            # Lane-dense multi-channel image block per grid step.
            pl.BlockSpec((H, W, ncb), lambda g_: (0, 0, g_)),
        ],
        out_specs=pl.BlockSpec((Ho, Wo, ncb), lambda g_: (0, 0, g_)),
        compiler_params=pltpu.CompilerParams(
            dimension_semantics=("parallel",),       # megacore sharding on v7x
            vmem_limit_bytes=48 * 1024 * 1024,       # > v5e/v6e defaults, < v7x 64 MiB/TC
        ),
    )(kh_taps, kw_taps, x_cl)

    # Layout plumbing back to NCHW.
    out = jnp.transpose(out_cl[:, :, :NC], (2, 0, 1)).reshape(N, C, Ho, Wo)
    return out


if __name__ == "__main__":
    # Small shapes consistent with the module's forward (NCHW image input).
    N, C, H, W = 2, 4, 16, 16
    kernel_size, sigma = 3, 2.0

    key = jax.random.PRNGKey(0)
    x = jax.random.normal(key, (N, C, H, W), dtype=jnp.float32)

    weight = make_gaussian_weight(C, kernel_size, sigma, dim=2)

    out = gaussian_smoothing_pallas(x, weight)
    out = jax.block_until_ready(out)

    # Pure-JAX reference (same semantics as F.conv2d(input, weight, groups=C)).
    ref = jax.lax.conv_general_dilated(
        x, weight,
        window_strides=(1, 1), padding="VALID",
        feature_group_count=C,
        dimension_numbers=("NCHW", "OIHW", "NCHW"),
    )
    assert out.shape == (N, C, H - kernel_size + 1, W - kernel_size + 1)
    assert jnp.allclose(out, ref, atol=1e-5, rtol=1e-5)

    print("KERNEL_OK")
</pallas_src>

<mosaic_0001>
module attributes {stable_mosaic.version = 11 : i64} {
  func.func @kernel(%arg0: i32, %arg1: memref<3xf32, #tpu.memory_space<smem>>, %arg2: memref<3xf32, #tpu.memory_space<smem>>, %arg3: memref<16x16x128xf32, #tpu.memory_space<vmem>>, %arg4: memref<14x14x128xf32, #tpu.memory_space<vmem>>) attributes {dimension_semantics = [#tpu.dimension_semantics<parallel>], iteration_bounds = array<i64: 1>, scalar_prefetch = 0 : i64, scratch_operands = 0 : i64, tpu.core_type = #tpu.core_type<tc>, window_params = [{transform_indices = @transform_0, window_bounds = array<i64: 3>}, {transform_indices = @transform_1, window_bounds = array<i64: 3>}, {transform_indices = @transform_2, window_bounds = array<i64: 16, 16, 128>}, {transform_indices = @transform_3, window_bounds = array<i64: 14, 14, 128>}]} {
    %c0 = arith.constant 0 : index
    %0 = memref.load %arg2[%c0] : memref<3xf32, #tpu.memory_space<smem>>
    %c0_0 = arith.constant 0 : index
    %c0_1 = arith.constant 0 : index
    %c0_2 = arith.constant 0 : index
    %1 = vector.load %arg3[%c0_0, %c0_1, %c0_2] : memref<16x16x128xf32, #tpu.memory_space<vmem>>, vector<16x14x128xf32>
    %c0_3 = arith.constant 0 : index
    %c2 = arith.constant 2 : index
    %c0_4 = arith.constant 0 : index
    %2 = vector.load %arg3[%c0_3, %c2, %c0_4] : memref<16x16x128xf32, #tpu.memory_space<vmem>>, vector<16x14x128xf32>
    %3 = arith.addf %1, %2 : vector<16x14x128xf32>
    %4 = vector.broadcast %0 : f32 to vector<16x14x128xf32>
    %5 = arith.mulf %4, %3 : vector<16x14x128xf32>
    %c1 = arith.constant 1 : index
    %6 = memref.load %arg2[%c1] : memref<3xf32, #tpu.memory_space<smem>>
    %c0_5 = arith.constant 0 : index
    %c1_6 = arith.constant 1 : index
    %c0_7 = arith.constant 0 : index
    %7 = vector.load %arg3[%c0_5, %c1_6, %c0_7] : memref<16x16x128xf32, #tpu.memory_space<vmem>>, vector<16x14x128xf32>
    %8 = vector.broadcast %6 : f32 to vector<16x14x128xf32>
    %9 = arith.mulf %8, %7 : vector<16x14x128xf32>
    %10 = arith.addf %5, %9 : vector<16x14x128xf32>
    %c0_8 = arith.constant 0 : index
    %11 = memref.load %arg1[%c0_8] : memref<3xf32, #tpu.memory_space<smem>>
    %12 = vector.extract_strided_slice %10 {offsets = [0, 0, 0], sizes = [14, 14, 128], strides = [1, 1, 1]} : vector<16x14x128xf32> to vector<14x14x128xf32>
    %13 = vector.extract_strided_slice %10 {offsets = [2, 0, 0], sizes = [14, 14, 128], strides = [1, 1, 1]} : vector<16x14x128xf32> to vector<14x14x128xf32>
    %14 = arith.addf %12, %13 : vector<14x14x128xf32>
    %15 = vector.broadcast %11 : f32 to vector<14x14x128xf32>
    %16 = arith.mulf %15, %14 : vector<14x14x128xf32>
    %c1_9 = arith.constant 1 : index
    %17 = memref.load %arg1[%c1_9] : memref<3xf32, #tpu.memory_space<smem>>
    %18 = vector.extract_strided_slice %10 {offsets = [1, 0, 0], sizes = [14, 14, 128], strides = [1, 1, 1]} : vector<16x14x128xf32> to vector<14x14x128xf32>
    %19 = vector.broadcast %17 : f32 to vector<14x14x128xf32>
    %20 = arith.mulf %19, %18 : vector<14x14x128xf32>
    %21 = arith.addf %16, %20 : vector<14x14x128xf32>
    %c0_10 = arith.constant 0 : index
    %c0_11 = arith.constant 0 : index
    %c0_12 = arith.constant 0 : index
    %22 = vector.load %arg4[%c0_10, %c0_11, %c0_12] : memref<14x14x128xf32, #tpu.memory_space<vmem>>, vector<14x14x128xf32>
    tpu.vector_store %arg4[%c0_10, %c0_11, %c0_12], %21 {strides = array<i32>} : memref<14x14x128xf32, #tpu.memory_space<vmem>>, vector<14x14x128xf32>,
    return
  }
  func.func @transform_0(%arg0: i32) -> i32 {
    %c0_i32 = arith.constant 0 : i32
    %c0_i32_0 = arith.constant 0 : i32
    return %c0_i32 : i32
  }
  func.func @transform_1(%arg0: i32) -> i32 {
    %c0_i32 = arith.constant 0 : i32
    %c0_i32_0 = arith.constant 0 : i32
    return %c0_i32 : i32
  }
  func.func @transform_2(%arg0: i32) -> (i32, i32, i32) {
    %c0_i32 = arith.constant 0 : i32
    %c0_i32_0 = arith.constant 0 : i32
    %c0_i32_1 = arith.constant 0 : i32
    return %c0_i32, %c0_i32_0, %arg0 : i32, i32, i32
  }
  func.func @transform_3(%arg0: i32) -> (i32, i32, i32) {
    %c0_i32 = arith.constant 0 : i32
    %c0_i32_0 = arith.constant 0 : i32
    %c0_i32_1 = arith.constant 0 : i32
    return %c0_i32, %c0_i32_0, %arg0 : i32, i32, i32
  }
}

</mosaic_0001>

<llo_original>
// kernel: tpu_custom_call.1
$region0: #{tpu_custom_call.1}
  #allocation0 [shape = 'u32[]', space=smem, size = 0x4, offset = 0x4, fixed_abs, tag = 'smem constant byte address 0x4 - core index']
  #allocation1 [shape = 'u32[144,128]{1,0:T(1,128)}', space=vmem, size = 0x12000, scoped, tag = 'internal scratch']
  %s0 = inlined_call_operand.hbm [shape: f32[3], index: 0, kind: input, shape index: {}]
  %s1 = inlined_call_operand.vmem [shape: f32[3], index: 1, kind: input, shape index: {}]
  %s2 = inlined_call_operand.hbm [shape: f32[16,16,128], index: 2, kind: input, shape index: {}]
  %s3 = inlined_call_operand.hbm [shape: f32[14,14,128], index: 3, kind: output, shape index: {}]
  %s4 = sld [smem:[#allocation0]]
  $region34: #{tpu_custom_call.1} parent=0
    _
  %s6 = ssub.s32 1, %s4
  %s7 = scalar_select 0, %s6, %s4
  $region1: #{tpu_custom_call.1} parent=0
    #allocation2 [shape = 'u8[512]{0}', space=smem, size = 0x200, scoped, tag = 'input window, operand 0, single buffered']
    #allocation3 [shape = 's32[1]{0}', space=sflag, size = 0x4, scoped, tag = 'scoped memory for tpu_custom_call.1']
    #allocation4 [shape = 's32[1]{0}', space=sflag, size = 0x4, scoped, tag = 'scoped memory for tpu_custom_call.1']
    #allocation5 [shape = 's32[1]{0}', space=sflag, size = 0x4, scoped, tag = 'scoped memory for tpu_custom_call.1']
    #allocation6 [shape = 's32[1]{0}', space=sflag, size = 0x4, scoped, tag = 'scoped memory for tpu_custom_call.1']
    #allocation7 [shape = 'u8[512]{0}', space=smem, size = 0x200, scoped, tag = 'input window, operand 1, single buffered']
    #allocation8 [shape = 'u8[131072]{0}', space=vmem, size = 0x20000, scoped, tag = 'input window, operand 2, single buffered']
    #allocation9 [shape = 'u8[114688]{0}', space=vmem, size = 0x1c000, scoped, tag = 'output window, operand 0, single buffered']
    %8 = vsyncpa [#allocation5], 0
    %9 = vsyncpa [#allocation6], 0
    %10 = vsyncpa [#allocation3], 0
    %11 = vsyncpa [#allocation4], 0
    // Predicated region
    $region2: #{tpu_custom_call.1} parent=1 // pred_check
      _
    $region3: #{tpu_custom_call.1} parent=1 // pred_check_branch
      %13 = sbr.rel (0) target = $region5
    $region4: #{tpu_custom_call.1} parent=1 // pred_region
      %s15 = ssub.s32 16, 16
      %16 = vsyncadd [#allocation5], %s15
      %19 = dma.hbm_to_smem %s0, 16, [#allocation2], [#allocation5]
    $region5: #{tpu_custom_call.1} parent=1 // pred_fallthru
      _
    // Predicated region
    $region6: #{tpu_custom_call.1} parent=1 // pred_check
      _
    $region7: #{tpu_custom_call.1} parent=1 // pred_check_branch
      %21 = sbr.rel (0) target = $region9
    $region8: #{tpu_custom_call.1} parent=1 // pred_region
      %s23 = ssub.s32 16, 16
      %24 = vsyncadd [#allocation6], %s23
      %s26 = sshll.u32 %s1, 4
      %s27 = int_to_ptr.vmem [resolvable:$true] %s26
      %29 = dma.vmem_to_smem %s27, 16, [#allocation7], [#allocation6]
    $region9: #{tpu_custom_call.1} parent=1 // pred_fallthru
      _
    // Predicated region
    $region10: #{tpu_custom_call.1} parent=1 // pred_check
      _
    $region11: #{tpu_custom_call.1} parent=1 // pred_check_branch
      %31 = sbr.rel (0) target = $region13
    $region12: #{tpu_custom_call.1} parent=1 // pred_region
      %s33 = ssub.s32 4096, 4096
      %34 = vsyncadd [#allocation3], %s33
      %s35 = sshll.u32 [#allocation8], 4
      %s36 = int_to_ptr.vmem [resolvable:$true] %s35
      %41 = dma.hbm_to_vmem [thread:$0]  %s2, 4096, %s36, [#allocation3], 128, 128, 8
    $region13: #{tpu_custom_call.1} parent=1 // pred_fallthru
      _
    // Predicated region
    $region14: #{tpu_custom_call.1} parent=1 // pred_check
      _
    $region15: #{tpu_custom_call.1} parent=1 // pred_check_branch
      %43 = sbr.rel (0) target = $region17
    $region16: #{tpu_custom_call.1} parent=1 // pred_region
      %44 = dma.done [#allocation5], 16
    $region17: #{tpu_custom_call.1} parent=1 // pred_fallthru
      _
    // Predicated region
    $region18: #{tpu_custom_call.1} parent=1 // pred_check
      _
    $region19: #{tpu_custom_call.1} parent=1 // pred_check_branch
      %46 = sbr.rel (0) target = $region21
    $region20: #{tpu_custom_call.1} parent=1 // pred_region
      %47 = dma.done [#allocation6], 16
    $region21: #{tpu_custom_call.1} parent=1 // pred_fallthru
      _
    // Predicated region
    $region22: #{tpu_custom_call.1} parent=1 // pred_check
      _
    $region23: #{tpu_custom_call.1} parent=1 // pred_check_branch
      %49 = sbr.rel (0) target = $region25
    $region24: #{tpu_custom_call.1} parent=1 // pred_region
      %50 = dma.done [#allocation3], 4096
    $region25: #{tpu_custom_call.1} parent=1 // pred_fallthru
      _
    %51 = sfence
    %s52 = sld [smem:[#allocation7]]
    %v53 = vld [vmem:[#allocation8] sm:$0xff]
    %v54 = vld [vmem:[#allocation8 + $0x8] sm:$0x3f]
    %v55 = vld [vmem:[#allocation8 + $0x10] sm:$0xff]
    %v56 = vld [vmem:[#allocation8 + $0x18] sm:$0x3f]
    %v57 = vld [vmem:[#allocation8 + $0x20] sm:$0xff]
    %v58 = vld [vmem:[#allocation8 + $0x28] sm:$0x3f]
    %v59 = vld [vmem:[#allocation8 + $0x30] sm:$0xff]
    %v60 = vld [vmem:[#allocation8 + $0x38] sm:$0x3f]
    %v61 = vld [vmem:[#allocation8 + $0x40] sm:$0xff]
    %v62 = vld [vmem:[#allocation8 + $0x48] sm:$0x3f]
    %v63 = vld [vmem:[#allocation8 + $0x50] sm:$0xff]
    %v64 = vld [vmem:[#allocation8 + $0x58] sm:$0x3f]
    %v65 = vld [vmem:[#allocation8 + $0x60] sm:$0xff]
    %v66 = vld [vmem:[#allocation8 + $0x68] sm:$0x3f]
    %v67 = vld [vmem:[#allocation8 + $0x70] sm:$0xff]
    %v68 = vld [vmem:[#allocation8 + $0x78] sm:$0x3f]
    %v69 = vld [vmem:[#allocation8 + $0x80] sm:$0xff]
    %v70 = vld [vmem:[#allocation8 + $0x88] sm:$0x3f]
    %v71 = vld [vmem:[#allocation8 + $0x90] sm:$0xff]
    %v72 = vld [vmem:[#allocation8 + $0x98] sm:$0x3f]
    %v73 = vld [vmem:[#allocation8 + $0xa0] sm:$0xff]
    %v74 = vld [vmem:[#allocation8 + $0xa8] sm:$0x3f]
    %v75 = vld [vmem:[#allocation8 + $0xb0] sm:$0xff]
    %v76 = vld [vmem:[#allocation8 + $0xb8] sm:$0x3f]
    %v77 = vld [vmem:[#allocation8 + $0xc0] sm:$0xff]
    %v78 = vld [vmem:[#allocation8 + $0xc8] sm:$0x3f]
    %v79 = vld [vmem:[#allocation8 + $0xd0] sm:$0xff]
    %v80 = vld [vmem:[#allocation8 + $0xd8] sm:$0x3f]
    %v81 = vld [vmem:[#allocation8 + $0xe0] sm:$0xff]
    %v82 = vld [vmem:[#allocation8 + $0xe8] sm:$0x3f]
    %v83 = vld [vmem:[#allocation8 + $0xf0] sm:$0xff]
    %v84 = vld [vmem:[#allocation8 + $0xf8] sm:$0x3f]
    %v85 = vld [vmem:[#allocation8 + $0x2] sm:$0xff]
    %v86 = vld [vmem:[#allocation8 + $0xa] sm:$0x3f]
    %v87 = vld [vmem:[#allocation8 + $0x12] sm:$0xff]
    %v88 = vld [vmem:[#allocation8 + $0x1a] sm:$0x3f]
    %v89 = vld [vmem:[#allocation8 + $0x22] sm:$0xff]
    %v90 = vld [vmem:[#allocation8 + $0x2a] sm:$0x3f]
    %v91 = vld [vmem:[#allocation8 + $0x32] sm:$0xff]
    %v92 = vld [vmem:[#allocation8 + $0x3a] sm:$0x3f]
    %v93 = vld [vmem:[#allocation8 + $0x42] sm:$0xff]
    %v94 = vld [vmem:[#allocation8 + $0x4a] sm:$0x3f]
    %v95 = vld [vmem:[#allocation8 + $0x52] sm:$0xff]
    %v96 = vld [vmem:[#allocation8 + $0x5a] sm:$0x3f]
    %v97 = vld [vmem:[#allocation8 + $0x62] sm:$0xff]
    %v98 = vld [vmem:[#allocation8 + $0x6a] sm:$0x3f]
    %v99 = vld [vmem:[#allocation8 + $0x72] sm:$0xff]
    %v100 = vld [vmem:[#allocation8 + $0x7a] sm:$0x3f]
    %v101 = vld [vmem:[#allocation8 + $0x82] sm:$0xff]
    %v102 = vld [vmem:[#allocation8 + $0x8a] sm:$0x3f]
    %v103 = vld [vmem:[#allocation8 + $0x92] sm:$0xff]
    %v104 = vld [vmem:[#allocation8 + $0x9a] sm:$0x3f]
    %v105 = vld [vmem:[#allocation8 + $0xa2] sm:$0xff]
    %v106 = vld [vmem:[#allocation8 + $0xaa] sm:$0x3f]
    %v107 = vld [vmem:[#allocation8 + $0xb2] sm:$0xff]
    %v108 = vld [vmem:[#allocation8 + $0xba] sm:$0x3f]
    %v109 = vld [vmem:[#allocation8 + $0xc2] sm:$0xff]
    %v110 = vld [vmem:[#allocation8 + $0xca] sm:$0x3f]
    %v111 = vld [vmem:[#allocation8 + $0xd2] sm:$0xff]
    %v112 = vld [vmem:[#allocation8 + $0xda] sm:$0x3f]
    %v113 = vld [vmem:[#allocation8 + $0xe2] sm:$0xff]
    %v114 = vld [vmem:[#allocation8 + $0xea] sm:$0x3f]
    %v115 = vld [vmem:[#allocation8 + $0xf2] sm:$0xff]
    %v116 = vld [vmem:[#allocation8 + $0xfa] sm:$0x3f]
    %v117 = vadd.f32 %v53, %v85
    %v118 = vadd.f32 %v54, %v86
    %v119 = vadd.f32 %v55, %v87
    %v120 = vadd.f32 %v56, %v88
    %v121 = vadd.f32 %v57, %v89
    %v122 = vadd.f32 %v58, %v90
    %v123 = vadd.f32 %v59, %v91
    %v124 = vadd.f32 %v60, %v92
    %v125 = vadd.f32 %v61, %v93
    %v126 = vadd.f32 %v62, %v94
    %v127 = vadd.f32 %v63, %v95
    %v128 = vadd.f32 %v64, %v96
    %v129 = vadd.f32 %v65, %v97
    %v130 = vadd.f32 %v66, %v98
    %v131 = vadd.f32 %v67, %v99
    %v132 = vadd.f32 %v68, %v100
    %v133 = vadd.f32 %v69, %v101
    %v134 = vadd.f32 %v70, %v102
    %v135 = vadd.f32 %v71, %v103
    %v136 = vadd.f32 %v72, %v104
    %v137 = vadd.f32 %v73, %v105
    %v138 = vadd.f32 %v74, %v106
    %v139 = vadd.f32 %v75, %v107
    %v140 = vadd.f32 %v76, %v108
    %v141 = vadd.f32 %v77, %v109
    %v142 = vadd.f32 %v78, %v110
    %v143 = vadd.f32 %v79, %v111
    %v144 = vadd.f32 %v80, %v112
    %v145 = vadd.f32 %v81, %v113
    %v146 = vadd.f32 %v82, %v114
    %v147 = vadd.f32 %v83, %v115
    %v148 = vadd.f32 %v84, %v116
    %v149 = vstv %s52
    %v150 = vmul.f32 %v149, %v117
    %v151 = vmul.f32 %v149, %v118
    %v152 = vmul.f32 %v149, %v119
    %v153 = vmul.f32 %v149, %v120
    %v154 = vmul.f32 %v149, %v121
    %v155 = vmul.f32 %v149, %v122
    %v156 = vmul.f32 %v149, %v123
    %v157 = vmul.f32 %v149, %v124
    %v158 = vmul.f32 %v149, %v125
    %v159 = vmul.f32 %v149, %v126
    %v160 = vmul.f32 %v149, %v127
    %v161 = vmul.f32 %v149, %v128
    %v162 = vmul.f32 %v149, %v129
    %v163 = vmul.f32 %v149, %v130
    %v164 = vmul.f32 %v149, %v131
    %v165 = vmul.f32 %v149, %v132
    %v166 = vmul.f32 %v149, %v133
    %v167 = vmul.f32 %v149, %v134
    %v168 = vmul.f32 %v149, %v135
    %v169 = vmul.f32 %v149, %v136
    %v170 = vmul.f32 %v149, %v137
    %v171 = vmul.f32 %v149, %v138
    %v172 = vmul.f32 %v149, %v139
    %v173 = vmul.f32 %v149, %v140
    %v174 = vmul.f32 %v149, %v141
    %v175 = vmul.f32 %v149, %v142
    %v176 = vmul.f32 %v149, %v143
    %v177 = vmul.f32 %v149, %v144
    %v178 = vmul.f32 %v149, %v145
    %v179 = vmul.f32 %v149, %v146
    %v180 = vmul.f32 %v149, %v147
    %v181 = vmul.f32 %v149, %v148
    %s182 = sld [smem:[#allocation7 + $0x1]]
    %v183 = vld [vmem:[#allocation8 + $0x1] sm:$0xff]
    %v184 = vld [vmem:[#allocation8 + $0x9] sm:$0x3f]
    %v185 = vld [vmem:[#allocation8 + $0x11] sm:$0xff]
    %v186 = vld [vmem:[#allocation8 + $0x19] sm:$0x3f]
    %v187 = vld [vmem:[#allocation8 + $0x21] sm:$0xff]
    %v188 = vld [vmem:[#allocation8 + $0x29] sm:$0x3f]
    %v189 = vld [vmem:[#allocation8 + $0x31] sm:$0xff]
    %v190 = vld [vmem:[#allocation8 + $0x39] sm:$0x3f]
    %v191 = vld [vmem:[#allocation8 + $0x41] sm:$0xff]
    %v192 = vld [vmem:[#allocation8 + $0x49] sm:$0x3f]
    %v193 = vld [vmem:[#allocation8 + $0x51] sm:$0xff]
    %v194 = vld [vmem:[#allocation8 + $0x59] sm:$0x3f]
    %v195 = vld [vmem:[#allocation8 + $0x61] sm:$0xff]
    %v196 = vld [vmem:[#allocation8 + $0x69] sm:$0x3f]
    %v197 = vld [vmem:[#allocation8 + $0x71] sm:$0xff]
    %v198 = vld [vmem:[#allocation8 + $0x79] sm:$0x3f]
    %v199 = vld [vmem:[#allocation8 + $0x81] sm:$0xff]
    %v200 = vld [vmem:[#allocation8 + $0x89] sm:$0x3f]
    %v201 = vld [vmem:[#allocation8 + $0x91] sm:$0xff]
    %v202 = vld [vmem:[#allocation8 + $0x99] sm:$0x3f]
    %v203 = vld [vmem:[#allocation8 + $0xa1] sm:$0xff]
    %v204 = vld [vmem:[#allocation8 + $0xa9] sm:$0x3f]
    %v205 = vld [vmem:[#allocation8 + $0xb1] sm:$0xff]
    %v206 = vld [vmem:[#allocation8 + $0xb9] sm:$0x3f]
    %v207 = vld [vmem:[#allocation8 + $0xc1] sm:$0xff]
    %v208 = vld [vmem:[#allocation8 + $0xc9] sm:$0x3f]
    %v209 = vld [vmem:[#allocation8 + $0xd1] sm:$0xff]
    %v210 = vld [vmem:[#allocation8 + $0xd9] sm:$0x3f]
    %v211 = vld [vmem:[#allocation8 + $0xe1] sm:$0xff]
    %v212 = vld [vmem:[#allocation8 + $0xe9] sm:$0x3f]
    %v213 = vld [vmem:[#allocation8 + $0xf1] sm:$0xff]
    %v214 = vld [vmem:[#allocation8 + $0xf9] sm:$0x3f]
    %v215 = vstv %s182
    %v216 = vmul.f32 %v215, %v183
    %v217 = vmul.f32 %v215, %v184
    %v218 = vmul.f32 %v215, %v185
    %v219 = vmul.f32 %v215, %v186
    %v220 = vmul.f32 %v215, %v187
    %v221 = vmul.f32 %v215, %v188
    %v222 = vmul.f32 %v215, %v189
    %v223 = vmul.f32 %v215, %v190
    %v224 = vmul.f32 %v215, %v191
    %v225 = vmul.f32 %v215, %v192
    %v226 = vmul.f32 %v215, %v193
    %v227 = vmul.f32 %v215, %v194
    %v228 = vmul.f32 %v215, %v195
    %v229 = vmul.f32 %v215, %v196
    %v230 = vmul.f32 %v215, %v197
    %v231 = vmul.f32 %v215, %v198
    %v232 = vmul.f32 %v215, %v199
    %v233 = vmul.f32 %v215, %v200
    %v234 = vmul.f32 %v215, %v201
    %v235 = vmul.f32 %v215, %v202
    %v236 = vmul.f32 %v215, %v203
    %v237 = vmul.f32 %v215, %v204
    %v238 = vmul.f32 %v215, %v205
    %v239 = vmul.f32 %v215, %v206
    %v240 = vmul.f32 %v215, %v207
    %v241 = vmul.f32 %v215, %v208
    %v242 = vmul.f32 %v215, %v209
    %v243 = vmul.f32 %v215, %v210
    %v244 = vmul.f32 %v215, %v211
    %v245 = vmul.f32 %v215, %v212
    %v246 = vmul.f32 %v215, %v213
    %v247 = vmul.f32 %v215, %v214
    %v248 = vadd.f32 %v150, %v216
    %v249 = vadd.f32 %v151, %v217
    %v250 = vadd.f32 %v152, %v218
    %v251 = vadd.f32 %v153, %v219
    %v252 = vadd.f32 %v154, %v220
    %v253 = vadd.f32 %v155, %v221
    %v254 = vadd.f32 %v156, %v222
    %v255 = vadd.f32 %v157, %v223
    %v256 = vadd.f32 %v158, %v224
    %v257 = vadd.f32 %v159, %v225
    %v258 = vadd.f32 %v160, %v226
    %v259 = vadd.f32 %v161, %v227
    %v260 = vadd.f32 %v162, %v228
    %v261 = vadd.f32 %v163, %v229
    %v262 = vadd.f32 %v164, %v230
    %v263 = vadd.f32 %v165, %v231
    %v264 = vadd.f32 %v166, %v232
    %v265 = vadd.f32 %v167, %v233
    %v266 = vadd.f32 %v168, %v234
    %v267 = vadd.f32 %v169, %v235
    %v268 = vadd.f32 %v170, %v236
    %v269 = vadd.f32 %v171, %v237
    %v270 = vadd.f32 %v172, %v238
    %v271 = vadd.f32 %v173, %v239
    %v272 = vadd.f32 %v174, %v240
    %v273 = vadd.f32 %v175, %v241
    %v274 = vadd.f32 %v176, %v242
    %v275 = vadd.f32 %v177, %v243
    %v276 = vadd.f32 %v178, %v244
    %v277 = vadd.f32 %v179, %v245
    %v278 = vadd.f32 %v180, %v246
    %v279 = vadd.f32 %v181, %v247
    %s280 = sld [smem:[#allocation2]]
    %v281 = vadd.f32 %v248, %v252
    %v282 = vadd.f32 %v249, %v253
    %v283 = vadd.f32 %v250, %v254
    %v284 = vadd.f32 %v251, %v255
    %v285 = vadd.f32 %v252, %v256
    %v286 = vadd.f32 %v253, %v257
    %v287 = vadd.f32 %v254, %v258
    %v288 = vadd.f32 %v255, %v259
    %v289 = vadd.f32 %v256, %v260
    %v290 = vadd.f32 %v257, %v261
    %v291 = vadd.f32 %v258, %v262
    %v292 = vadd.f32 %v259, %v263
    %v293 = vadd.f32 %v260, %v264
    %v294 = vadd.f32 %v261, %v265
    %v295 = vadd.f32 %v262, %v266
    %v296 = vadd.f32 %v263, %v267
    %v297 = vadd.f32 %v264, %v268
    %v298 = vadd.f32 %v265, %v269
    %v299 = vadd.f32 %v266, %v270
    %v300 = vadd.f32 %v267, %v271
    %v301 = vadd.f32 %v268, %v272
    %v302 = vadd.f32 %v269, %v273
    %v303 = vadd.f32 %v270, %v274
    %v304 = vadd.f32 %v271, %v275
    %v305 = vadd.f32 %v272, %v276
    %v306 = vadd.f32 %v273, %v277
    %v307 = vadd.f32 %v274, %v278
    %v308 = vadd.f32 %v275, %v279
    %v309 = vstv %s280
    %v310 = vmul.f32 %v309, %v281
    %v311 = vmul.f32 %v309, %v282
    %v312 = vmul.f32 %v309, %v283
    %v313 = vmul.f32 %v309, %v284
    %v314 = vmul.f32 %v309, %v285
    %v315 = vmul.f32 %v309, %v286
    %v316 = vmul.f32 %v309, %v287
    %v317 = vmul.f32 %v309, %v288
    %v318 = vmul.f32 %v309, %v289
    %v319 = vmul.f32 %v309, %v290
    %v320 = vmul.f32 %v309, %v291
    %v321 = vmul.f32 %v309, %v292
    %v322 = vmul.f32 %v309, %v293
    %v323 = vmul.f32 %v309, %v294
    %v324 = vmul.f32 %v309, %v295
    %v325 = vmul.f32 %v309, %v296
    %v326 = vmul.f32 %v309, %v297
    %v327 = vmul.f32 %v309, %v298
    %v328 = vmul.f32 %v309, %v299
    %v329 = vmul.f32 %v309, %v300
    %v330 = vmul.f32 %v309, %v301
    %v331 = vmul.f32 %v309, %v302
    %v332 = vmul.f32 %v309, %v303
    %v333 = vmul.f32 %v309, %v304
    %v334 = vmul.f32 %v309, %v305
    %v335 = vmul.f32 %v309, %v306
    %v336 = vmul.f32 %v309, %v307
    %v337 = vmul.f32 %v309, %v308
    %s338 = sld [smem:[#allocation2 + $0x1]]
    %v339 = vstv %s338
    %v340 = vmul.f32 %v339, %v250
    %v341 = vmul.f32 %v339, %v251
    %v342 = vmul.f32 %v339, %v252
    %v343 = vmul.f32 %v339, %v253
    %v344 = vmul.f32 %v339, %v254
    %v345 = vmul.f32 %v339, %v255
    %v346 = vmul.f32 %v339, %v256
    %v347 = vmul.f32 %v339, %v257
    %v348 = vmul.f32 %v339, %v258
    %v349 = vmul.f32 %v339, %v259
    %v350 = vmul.f32 %v339, %v260
    %v351 = vmul.f32 %v339, %v261
    %v352 = vmul.f32 %v339, %v262
    %v353 = vmul.f32 %v339, %v263
    %v354 = vmul.f32 %v339, %v264
    %v355 = vmul.f32 %v339, %v265
    %v356 = vmul.f32 %v339, %v266
    %v357 = vmul.f32 %v339, %v267
    %v358 = vmul.f32 %v339, %v268
    %v359 = vmul.f32 %v339, %v269
    %v360 = vmul.f32 %v339, %v270
    %v361 = vmul.f32 %v339, %v271
    %v362 = vmul.f32 %v339, %v272
    %v363 = vmul.f32 %v339, %v273
    %v364 = vmul.f32 %v339, %v274
    %v365 = vmul.f32 %v339, %v275
    %v366 = vmul.f32 %v339, %v276
    %v367 = vmul.f32 %v339, %v277
    %v368 = vadd.f32 %v310, %v340
    %v369 = vadd.f32 %v311, %v341
    %v370 = vadd.f32 %v312, %v342
    %v371 = vadd.f32 %v313, %v343
    %v372 = vadd.f32 %v314, %v344
    %v373 = vadd.f32 %v315, %v345
    %v374 = vadd.f32 %v316, %v346
    %v375 = vadd.f32 %v317, %v347
    %v376 = vadd.f32 %v318, %v348
    %v377 = vadd.f32 %v319, %v349
    %v378 = vadd.f32 %v320, %v350
    %v379 = vadd.f32 %v321, %v351
    %v380 = vadd.f32 %v322, %v352
    %v381 = vadd.f32 %v323, %v353
    %v382 = vadd.f32 %v324, %v354
    %v383 = vadd.f32 %v325, %v355
    %v384 = vadd.f32 %v326, %v356
    %v385 = vadd.f32 %v327, %v357
    %v386 = vadd.f32 %v328, %v358
    %v387 = vadd.f32 %v329, %v359
    %v388 = vadd.f32 %v330, %v360
    %v389 = vadd.f32 %v331, %v361
    %v390 = vadd.f32 %v332, %v362
    %v391 = vadd.f32 %v333, %v363
    %v392 = vadd.f32 %v334, %v364
    %v393 = vadd.f32 %v335, %v365
    %v394 = vadd.f32 %v336, %v366
    %v395 = vadd.f32 %v337, %v367
    %396 = vst [vmem:[#allocation9] sm:$0xff] %v368
    %397 = vst [vmem:[#allocation9 + $0x8] sm:$0x3f] %v369
    %398 = vst [vmem:[#allocation9 + $0x10] sm:$0xff] %v370
    %399 = vst [vmem:[#allocation9 + $0x18] sm:$0x3f] %v371
    %400 = vst [vmem:[#allocation9 + $0x20] sm:$0xff] %v372
    %401 = vst [vmem:[#allocation9 + $0x28] sm:$0x3f] %v373
    %402 = vst [vmem:[#allocation9 + $0x30] sm:$0xff] %v374
    %403 = vst [vmem:[#allocation9 + $0x38] sm:$0x3f] %v375
    %404 = vst [vmem:[#allocation9 + $0x40] sm:$0xff] %v376
    %405 = vst [vmem:[#allocation9 + $0x48] sm:$0x3f] %v377
    %406 = vst [vmem:[#allocation9 + $0x50] sm:$0xff] %v378
    %407 = vst [vmem:[#allocation9 + $0x58] sm:$0x3f] %v379
    %408 = vst [vmem:[#allocation9 + $0x60] sm:$0xff] %v380
    %409 = vst [vmem:[#allocation9 + $0x68] sm:$0x3f] %v381
    %410 = vst [vmem:[#allocation9 + $0x70] sm:$0xff] %v382
    %411 = vst [vmem:[#allocation9 + $0x78] sm:$0x3f] %v383
    %412 = vst [vmem:[#allocation9 + $0x80] sm:$0xff] %v384
    %413 = vst [vmem:[#allocation9 + $0x88] sm:$0x3f] %v385
    %414 = vst [vmem:[#allocation9 + $0x90] sm:$0xff] %v386
    %415 = vst [vmem:[#allocation9 + $0x98] sm:$0x3f] %v387
    %416 = vst [vmem:[#allocation9 + $0xa0] sm:$0xff] %v388
    %417 = vst [vmem:[#allocation9 + $0xa8] sm:$0x3f] %v389
    %418 = vst [vmem:[#allocation9 + $0xb0] sm:$0xff] %v390
    %419 = vst [vmem:[#allocation9 + $0xb8] sm:$0x3f] %v391
    %420 = vst [vmem:[#allocation9 + $0xc0] sm:$0xff] %v392
    %421 = vst [vmem:[#allocation9 + $0xc8] sm:$0x3f] %v393
    %422 = vst [vmem:[#allocation9 + $0xd0] sm:$0xff] %v394
    %423 = vst [vmem:[#allocation9 + $0xd8] sm:$0x3f] %v395
    // Predicated region
    $region26: #{tpu_custom_call.1} parent=1 // pred_check
      _
    $region27: #{tpu_custom_call.1} parent=1 // pred_check_branch
      %425 = sbr.rel (0) target = $region29
    $region28: #{tpu_custom_call.1} parent=1 // pred_region
      %s427 = ssub.s32 3584, 3584
      %428 = vsyncadd [#allocation4], %s427
      %s429 = sshll.u32 [#allocation9], 4
      %s430 = int_to_ptr.vmem [resolvable:$true] %s429
      %435 = dma.vmem_to_hbm [thread:$0]  %s430, 3584, %s3, [#allocation4], 128, 128, 8
    $region29: #{tpu_custom_call.1} parent=1 // pred_fallthru
      _
    // Predicated region
    $region30: #{tpu_custom_call.1} parent=1 // pred_check
      _
    $region31: #{tpu_custom_call.1} parent=1 // pred_check_branch
      %437 = sbr.rel (0) target = $region33
    $region32: #{tpu_custom_call.1} parent=1 // pred_region
      %438 = dma.done [#allocation4], 3584
    $region33: #{tpu_custom_call.1} parent=1 // pred_fallthru
      _
    %439 = vsyncpa [#allocation3], 1
    %440 = vsyncpa [#allocation4], 1
    %441 = vsyncpa [#allocation5], 1
    %442 = vsyncpa [#allocation6], 1

</llo_original>
